<compile_context>
chip_gen: v6e
topology: v6e:2x2x1
jax: 0.10.0
libtpu: 0.0.40
codegen_flags: <defaults>
</compile_context>

<pallas_src>
import jax
import jax.numpy as jnp
from jax.experimental import pallas as pl
from jax.experimental.pallas import tpu as pltpu

IN_FEATURES = 14 * 9   # 126
K_PAD = 128            # padded feature dim (lane-aligned)
HIDDEN = 128
OUT_FEATURES = 13
TB_DEFAULT = 512       # batch tile (multiple of 256 for v6e/v7x MXU)


def _round_up(n, m):
    return ((n + m - 1) // m) * m


def _mlp_kernel(x_ref, w1_ref, b1_ref, w2_ref, b2_ref, o_ref):
    # x tile (TB, 128) bf16, w1 (128, 128) bf16 -> MXU, accumulate in f32.
    h = jnp.dot(x_ref[...], w1_ref[...], preferred_element_type=jnp.float32)
    h = jnp.maximum(h + b1_ref[...], 0.0)                      # bias + ReLU in f32 (VPU)
    y = jnp.dot(h, w2_ref[...], preferred_element_type=jnp.float32)
    o_ref[...] = (y + b2_ref[...]).astype(o_ref.dtype)


def net_forward(x, w1, b1, w2, b2, *, tb=TB_DEFAULT):
    """x: (B, 14, 9) float32 -> (B, 13) float32."""
    B = x.shape[0]
    x_flat = x.reshape(B, -1)                                  # Flatten (glue, plain JAX)
    assert x_flat.shape[1] == IN_FEATURES

    # Pad K 126 -> 128 and cast the heavy stream to bf16 (zeros contribute nothing).
    x_pad = jnp.pad(x_flat, ((0, 0), (0, K_PAD - IN_FEATURES))).astype(jnp.bfloat16)
    w1_pad = jnp.pad(w1, ((0, K_PAD - IN_FEATURES), (0, 0))).astype(jnp.bfloat16)
    b1_2d = b1.reshape(1, HIDDEN).astype(jnp.float32)
    w2_f32 = w2.astype(jnp.float32)
    b2_2d = b2.reshape(1, OUT_FEATURES).astype(jnp.float32)

    # Batch tile: multiple of 16 (bf16 sublane packing); pad B up so tiles divide evenly.
    tb = min(tb, _round_up(B, 16))
    tb = max(tb, 16)
    Bp = _round_up(B, tb)
    if Bp != B:
        x_pad = jnp.pad(x_pad, ((0, Bp - B), (0, 0)))

    grid = (Bp // tb,)

    cost = pl.CostEstimate(
        flops=2 * Bp * (K_PAD * HIDDEN + HIDDEN * OUT_FEATURES),
        transcendentals=0,
        bytes_accessed=(Bp * K_PAD * 2 + K_PAD * HIDDEN * 2
                        + HIDDEN * 4 + HIDDEN * OUT_FEATURES * 4 + OUT_FEATURES * 4
                        + Bp * OUT_FEATURES * 4),
    )

    out = pl.pallas_call(
        _mlp_kernel,
        out_shape=jax.ShapeDtypeStruct((Bp, OUT_FEATURES), jnp.float32),
        grid=grid,
        in_specs=[
            pl.BlockSpec((tb, K_PAD), lambda i: (i, 0)),            # x: tiled over batch
            pl.BlockSpec((K_PAD, HIDDEN), lambda i: (0, 0)),        # w1: VMEM-resident
            pl.BlockSpec((1, HIDDEN), lambda i: (0, 0)),            # b1: VMEM-resident
            pl.BlockSpec((HIDDEN, OUT_FEATURES), lambda i: (0, 0)),  # w2: VMEM-resident
            pl.BlockSpec((1, OUT_FEATURES), lambda i: (0, 0)),      # b2: VMEM-resident
        ],
        out_specs=pl.BlockSpec((tb, OUT_FEATURES), lambda i: (i, 0)),
        compiler_params=pltpu.CompilerParams(
            dimension_semantics=("parallel",),                      # 2x on v7x megacore
        ),
        cost_estimate=cost,
    )(x_pad, w1_pad, b1_2d, w2_f32, b2_2d)

    return out[:B]


def init_params(key):
    """Deterministic init mimicking torch.nn.Linear default (uniform ±1/sqrt(fan_in))."""
    k1, k2, k3, k4 = jax.random.split(key, 4)
    bound1 = 1.0 / jnp.sqrt(jnp.float32(IN_FEATURES))
    bound2 = 1.0 / jnp.sqrt(jnp.float32(HIDDEN))
    w1 = jax.random.uniform(k1, (IN_FEATURES, HIDDEN), jnp.float32, -bound1, bound1)
    b1 = jax.random.uniform(k2, (HIDDEN,), jnp.float32, -bound1, bound1)
    w2 = jax.random.uniform(k3, (HIDDEN, OUT_FEATURES), jnp.float32, -bound2, bound2)
    b2 = jax.random.uniform(k4, (OUT_FEATURES,), jnp.float32, -bound2, bound2)
    return w1, b1, w2, b2


if __name__ == "__main__":
    key = jax.random.PRNGKey(0)
    k_params, k_x = jax.random.split(key)
    w1, b1, w2, b2 = init_params(k_params)

    B = 4
    x = jax.random.normal(k_x, (B, 14, 9), jnp.float32)

    out = net_forward(x, w1, b1, w2, b2)
    out = jax.block_until_ready(out)

    # Reference in plain f32 JAX; bf16 first matmul introduces ~1e-3 level deviation.
    ref = jnp.maximum(x.reshape(B, -1) @ w1 + b1, 0.0) @ w2 + b2
    assert out.shape == (B, OUT_FEATURES)
    assert jnp.allclose(out, ref, atol=5e-2, rtol=5e-2), float(jnp.max(jnp.abs(out - ref)))

    print("KERNEL_OK")
</pallas_src>

<mosaic_0001>
module attributes {stable_mosaic.version = 11 : i64} {
  func.func @_mlp_kernel(%arg0: i32, %arg1: memref<16x128xbf16, #tpu.memory_space<vmem>>, %arg2: memref<128x128xbf16, #tpu.memory_space<vmem>>, %arg3: memref<1x128xf32, #tpu.memory_space<vmem>>, %arg4: memref<128x13xf32, #tpu.memory_space<vmem>>, %arg5: memref<1x13xf32, #tpu.memory_space<vmem>>, %arg6: memref<16x13xf32, #tpu.memory_space<vmem>>) attributes {dimension_semantics = [#tpu.dimension_semantics<parallel>], iteration_bounds = array<i64: 1>, scalar_prefetch = 0 : i64, scratch_operands = 0 : i64, tpu.core_type = #tpu.core_type<tc>, window_params = [{transform_indices = @transform_0, window_bounds = array<i64: 16, 128>}, {pipeline_mode = #tpu.pipeline_mode<synchronous>, transform_indices = @transform_1, window_bounds = array<i64: 128, 128>}, {pipeline_mode = #tpu.pipeline_mode<synchronous>, transform_indices = @transform_2, window_bounds = array<i64: 1, 128>}, {pipeline_mode = #tpu.pipeline_mode<synchronous>, transform_indices = @transform_3, window_bounds = array<i64: 128, 13>}, {pipeline_mode = #tpu.pipeline_mode<synchronous>, transform_indices = @transform_4, window_bounds = array<i64: 1, 13>}, {transform_indices = @transform_5, window_bounds = array<i64: 16, 13>}]} {
    %c0 = arith.constant 0 : index
    %c0_0 = arith.constant 0 : index
    %0 = vector.load %arg1[%c0, %c0_0] : memref<16x128xbf16, #tpu.memory_space<vmem>>, vector<16x128xbf16>
    %c0_1 = arith.constant 0 : index
    %c0_2 = arith.constant 0 : index
    %1 = vector.load %arg2[%c0_1, %c0_2] : memref<128x128xbf16, #tpu.memory_space<vmem>>, vector<128x128xbf16>
    %cst = arith.constant dense<0.000000e+00> : vector<16x128xf32>
    %2 = tpu.matmul %0, %1, %cst {dimension_numbers = #tpu.dot_dimension_numbers<[1], [0], [0], [1], [0, 0, 1, 1], [], []>} : vector<16x128xbf16>, vector<128x128xbf16>, vector<16x128xf32> -> vector<16x128xf32>
    %c0_3 = arith.constant 0 : index
    %c0_4 = arith.constant 0 : index
    %3 = vector.load %arg3[%c0_3, %c0_4] : memref<1x128xf32, #tpu.memory_space<vmem>>, vector<1x128xf32>
    %4 = vector.broadcast %3 : vector<1x128xf32> to vector<16x128xf32>
    %5 = arith.addf %2, %4 : vector<16x128xf32>
    %cst_5 = arith.constant 0.000000e+00 : f32
    %6 = vector.broadcast %cst_5 : f32 to vector<16x128xf32>
    %7 = arith.maximumf %5, %6 : vector<16x128xf32>
    %c0_6 = arith.constant 0 : index
    %c0_7 = arith.constant 0 : index
    %8 = vector.load %arg4[%c0_6, %c0_7] : memref<128x13xf32, #tpu.memory_space<vmem>>, vector<128x13xf32>
    %cst_8 = arith.constant dense<0.000000e+00> : vector<16x13xf32>
    %9 = tpu.matmul %7, %8, %cst_8 {dimension_numbers = #tpu.dot_dimension_numbers<[1], [0], [0], [1], [0, 0, 1, 1], [], []>} : vector<16x128xf32>, vector<128x13xf32>, vector<16x13xf32> -> vector<16x13xf32>
    %c0_9 = arith.constant 0 : index
    %c0_10 = arith.constant 0 : index
    %10 = vector.load %arg5[%c0_9, %c0_10] : memref<1x13xf32, #tpu.memory_space<vmem>>, vector<1x13xf32>
    %11 = vector.broadcast %10 : vector<1x13xf32> to vector<16x13xf32>
    %12 = arith.addf %9, %11 : vector<16x13xf32>
    %c0_11 = arith.constant 0 : index
    %c0_12 = arith.constant 0 : index
    %13 = vector.load %arg6[%c0_11, %c0_12] : memref<16x13xf32, #tpu.memory_space<vmem>>, vector<16x13xf32>
    tpu.vector_store %arg6[%c0_11, %c0_12], %12 {strides = array<i32>} : memref<16x13xf32, #tpu.memory_space<vmem>>, vector<16x13xf32>,
    return
  }
  func.func @transform_0(%arg0: i32) -> (i32, i32) {
    %c0_i32 = arith.constant 0 : i32
    %c0_i32_0 = arith.constant 0 : i32
    return %arg0, %c0_i32 : i32, i32
  }
  func.func @transform_1(%arg0: i32) -> (i32, i32) {
    %c0_i32 = arith.constant 0 : i32
    %c0_i32_0 = arith.constant 0 : i32
    %c0_i32_1 = arith.constant 0 : i32
    return %c0_i32, %c0_i32_0 : i32, i32
  }
  func.func @transform_2(%arg0: i32) -> (i32, i32) {
    %c0_i32 = arith.constant 0 : i32
    %c0_i32_0 = arith.constant 0 : i32
    %c0_i32_1 = arith.constant 0 : i32
    return %c0_i32, %c0_i32_0 : i32, i32
  }
  func.func @transform_3(%arg0: i32) -> (i32, i32) {
    %c0_i32 = arith.constant 0 : i32
    %c0_i32_0 = arith.constant 0 : i32
    %c0_i32_1 = arith.constant 0 : i32
    return %c0_i32, %c0_i32_0 : i32, i32
  }
  func.func @transform_4(%arg0: i32) -> (i32, i32) {
    %c0_i32 = arith.constant 0 : i32
    %c0_i32_0 = arith.constant 0 : i32
    %c0_i32_1 = arith.constant 0 : i32
    return %c0_i32, %c0_i32_0 : i32, i32
  }
  func.func @transform_5(%arg0: i32) -> (i32, i32) {
    %c0_i32 = arith.constant 0 : i32
    %c0_i32_0 = arith.constant 0 : i32
    return %arg0, %c0_i32 : i32, i32
  }
}

</mosaic_0001>

<llo_original>
// kernel: tpu_custom_call.1
$region0: #{tpu_custom_call.1}
  #allocation0 [shape = 'u32[]', space=smem, size = 0x4, offset = 0x4, fixed_abs, tag = 'smem constant byte address 0x4 - core index']
  #allocation1 [shape = 'u32[144,128]{1,0:T(1,128)}', space=vmem, size = 0x12000, scoped, tag = 'internal scratch']
  %s0 = inlined_call_operand.vmem [shape: bf16[16,128], index: 0, kind: input, shape index: {}]
  %s1 = inlined_call_operand.vmem [shape: bf16[128,128], index: 1, kind: input, shape index: {}]
  %s2 = inlined_call_operand.vmem [shape: f32[1,128], index: 2, kind: input, shape index: {}]
  %s3 = inlined_call_operand.vmem [shape: f32[128,13], index: 3, kind: input, shape index: {}]
  %s4 = inlined_call_operand.vmem [shape: f32[1,13], index: 4, kind: input, shape index: {}]
  %s5 = inlined_call_operand.hbm [shape: f32[16,13], index: 5, kind: output, shape index: {}]
  %s6 = sld [smem:[#allocation0]]
  $region30: #{tpu_custom_call.1} parent=0
    _
  %s8 = ssub.s32 1, %s6
  %s9 = scalar_select 0, %s8, %s6
  $region1: #{tpu_custom_call.1} parent=0
    #allocation2 [shape = 'u8[8192]{0}', space=vmem, size = 0x2000, scoped, tag = 'output window, operand 0, single buffered']
    #allocation3 [shape = 's32[1]{0}', space=sflag, size = 0x4, scoped, tag = 'scoped memory for tpu_custom_call.1']
    %10 = vsyncpa [#allocation3], 0
    // Predicated region
    $region2: #{tpu_custom_call.1} parent=1 // pred_check
      _
    $region3: #{tpu_custom_call.1} parent=1 // pred_check_branch
      %12 = sbr.rel (0) target = $region5
    $region4: #{tpu_custom_call.1} parent=1 // pred_region
      _
    $region5: #{tpu_custom_call.1} parent=1 // pred_fallthru
      _
    // Predicated region
    $region6: #{tpu_custom_call.1} parent=1 // pred_check
      _
    $region7: #{tpu_custom_call.1} parent=1 // pred_check_branch
      %14 = sbr.rel (0) target = $region9
    $region8: #{tpu_custom_call.1} parent=1 // pred_region
      _
    $region9: #{tpu_custom_call.1} parent=1 // pred_fallthru
      _
    // Predicated region
    $region10: #{tpu_custom_call.1} parent=1 // pred_check
      _
    $region11: #{tpu_custom_call.1} parent=1 // pred_check_branch
      %16 = sbr.rel (0) target = $region13
    $region12: #{tpu_custom_call.1} parent=1 // pred_region
      _
    $region13: #{tpu_custom_call.1} parent=1 // pred_fallthru
      _
    // Predicated region
    $region14: #{tpu_custom_call.1} parent=1 // pred_check
      _
    $region15: #{tpu_custom_call.1} parent=1 // pred_check_branch
      %18 = sbr.rel (0) target = $region17
    $region16: #{tpu_custom_call.1} parent=1 // pred_region
      _
    $region17: #{tpu_custom_call.1} parent=1 // pred_fallthru
      _
    // Predicated region
    $region18: #{tpu_custom_call.1} parent=1 // pred_check
      _
    $region19: #{tpu_custom_call.1} parent=1 // pred_check_branch
      %20 = sbr.rel (0) target = $region21
    $region20: #{tpu_custom_call.1} parent=1 // pred_region
      _
    $region21: #{tpu_custom_call.1} parent=1 // pred_fallthru
      _
    %v22 = vld [vmem:[%s0] sm:$0xf]
    %v23 = vld [vmem:[%s0 + $0x4] sm:$0xf]
    %v24 = vld [vmem:[%s1] sm:$0xf]
    %v25 = vld [vmem:[%s1 + $0x4] sm:$0xf]
    %v26 = vld [vmem:[%s1 + $0x8] sm:$0xf]
    %v27 = vld [vmem:[%s1 + $0xc] sm:$0xf]
    %v28 = vld [vmem:[%s1 + $0x10] sm:$0xf]
    %v29 = vld [vmem:[%s1 + $0x14] sm:$0xf]
    %v30 = vld [vmem:[%s1 + $0x18] sm:$0xf]
    %v31 = vld [vmem:[%s1 + $0x1c] sm:$0xf]
    %v32 = vld [vmem:[%s1 + $0x20] sm:$0xf]
    %v33 = vld [vmem:[%s1 + $0x24] sm:$0xf]
    %v34 = vld [vmem:[%s1 + $0x28] sm:$0xf]
    %v35 = vld [vmem:[%s1 + $0x2c] sm:$0xf]
    %v36 = vld [vmem:[%s1 + $0x30] sm:$0xf]
    %v37 = vld [vmem:[%s1 + $0x34] sm:$0xf]
    %v38 = vld [vmem:[%s1 + $0x38] sm:$0xf]
    %v39 = vld [vmem:[%s1 + $0x3c] sm:$0xf]
    %v40 = vld [vmem:[%s2] sm:$0x1]
    %v42 = vlaneseq
    %v43 = vshrl.u32 %v42, 7
    %v44 = vsub.s32 0, %v43
    %v45 = vrot.slane %v40, %v44
    %v49 = vunpack.c.l.b16 %v22
    %v50 = vunpack.c.l.b16 %v23
    %v51 = vpack.c.b16 %v50, %v49
    %v69 = vunpack.c.l.b16 %v24
    %v70 = vunpack.c.l.b16 %v25
    %v71 = vunpack.c.l.b16 %v26
    %v72 = vunpack.c.l.b16 %v27
    %v73 = vunpack.c.l.b16 %v28
    %v74 = vunpack.c.l.b16 %v29
    %v75 = vunpack.c.l.b16 %v30
    %v76 = vunpack.c.l.b16 %v31
    %v77 = vunpack.c.l.b16 %v32
    %v78 = vunpack.c.l.b16 %v33
    %v79 = vunpack.c.l.b16 %v34
    %v80 = vunpack.c.l.b16 %v35
    %v81 = vunpack.c.l.b16 %v36
    %v82 = vunpack.c.l.b16 %v37
    %v83 = vunpack.c.l.b16 %v38
    %v84 = vunpack.c.l.b16 %v39
    %v85 = vpack.c.b16 %v70, %v69
    %v86 = vpack.c.b16 %v72, %v71
    %v87 = vpack.c.b16 %v74, %v73
    %v88 = vpack.c.b16 %v76, %v75
    %v89 = vpack.c.b16 %v78, %v77
    %v90 = vpack.c.b16 %v80, %v79
    %v91 = vpack.c.b16 %v82, %v81
    %v92 = vpack.c.b16 %v84, %v83
    %101 = vmatprep.subr.bf16.mxu0 0
    %102 = vmatpush1.bf16.msra.mxu0 %v92
    %103 = vmatprep.subr.bf16.mxu0 0
    %104 = vmatpush1.bf16.msra.mxu0 %v91
    %105 = vmatprep.subr.bf16.mxu0 0
    %106 = vmatpush1.bf16.msra.mxu0 %v90
    %107 = vmatprep.subr.bf16.mxu0 0
    %108 = vmatpush1.bf16.msra.mxu0 %v89
    %109 = vmatprep.subr.bf16.mxu0 0
    %110 = vmatpush1.bf16.msra.mxu0 %v88
    %111 = vmatprep.subr.bf16.mxu0 0
    %112 = vmatpush1.bf16.msra.mxu0 %v87
    %113 = vmatprep.subr.bf16.mxu0 0
    %114 = vmatpush1.bf16.msra.mxu0 %v86
    %115 = vmatprep.subr.bf16.mxu0 0
    %116 = vmatpush1.bf16.msra.mxu0 %v85
    %117 = vmatprep.subr.bf16.mxu0 0
    %118 = vmatpush2.bf16.msra.mxu0 0
    %119 = vmatprep.subr.bf16.mxu0 0
    %120 = vmatpush2.bf16.msra.mxu0 0
    %121 = vmatprep.subr.bf16.mxu0 0
    %122 = vmatpush2.bf16.msra.mxu0 0
    %123 = vmatprep.subr.bf16.mxu0 0
    %124 = vmatpush2.bf16.msra.mxu0 0
    %125 = vmatprep.subr.bf16.mxu0 0
    %126 = vmatpush2.bf16.msra.mxu0 0
    %127 = vmatprep.subr.bf16.mxu0 0
    %128 = vmatpush2.bf16.msra.mxu0 0
    %129 = vmatprep.subr.bf16.mxu0 0
    %130 = vmatpush2.bf16.msra.mxu0 0
    %131 = vmatprep.subr.bf16.mxu0 0
    %132 = vmatpush2.bf16.msra.mxu0 0
    %133 = vmatprep.mubr.bf16.mxu0 0
    %134 = vmatmul.mubr.bf16.gmra.mxu0 %v51
    %v135 = vpop.f32.mrf.mxu0
    %v136 = vadd.f32 %v45, %v135
    %v137 = vpop.f32.mrf.mxu0
    %v138 = vpop.f32.mrf.mxu0
    %v139 = vadd.f32 %v45, %v138
    %v140 = vpop.f32.mrf.mxu0
    %141 = vdwg.mxu0
    %v142 = vmax.f32 %v136, 0.0
    %v143 = vmax.f32 %v139, 0.0
    %v144 = vld [vmem:[%s3] sm:$0xff]
    %v145 = vld [vmem:[%s3 + $0x8] sm:$0xff]
    %v146 = vld [vmem:[%s3 + $0x10] sm:$0xff]
    %v147 = vld [vmem:[%s3 + $0x18] sm:$0xff]
    %v148 = vld [vmem:[%s3 + $0x20] sm:$0xff]
    %v149 = vld [vmem:[%s3 + $0x28] sm:$0xff]
    %v150 = vld [vmem:[%s3 + $0x30] sm:$0xff]
    %v151 = vld [vmem:[%s3 + $0x38] sm:$0xff]
    %v152 = vld [vmem:[%s3 + $0x40] sm:$0xff]
    %v153 = vld [vmem:[%s3 + $0x48] sm:$0xff]
    %v154 = vld [vmem:[%s3 + $0x50] sm:$0xff]
    %v155 = vld [vmem:[%s3 + $0x58] sm:$0xff]
    %v156 = vld [vmem:[%s3 + $0x60] sm:$0xff]
    %v157 = vld [vmem:[%s3 + $0x68] sm:$0xff]
    %v158 = vld [vmem:[%s3 + $0x70] sm:$0xff]
    %v159 = vld [vmem:[%s3 + $0x78] sm:$0xff]
    %v160 = vld [vmem:[%s4] sm:$0x1]
    %v162 = vlaneseq
    %v163 = vshrl.u32 %v162, 7
    %v164 = vsub.s32 0, %v163
    %v165 = vrot.slane %v160, %v164
    %167 = vmatprep.subr.mxu0 0.0
    %168 = vmatpush1.msra.mxu0 %v159
    %169 = vmatprep.subr.mxu0 0.0
    %170 = vmatpush1.msra.mxu0 %v158
    %171 = vmatprep.subr.mxu0 0.0
    %172 = vmatpush1.msra.mxu0 %v157
    %173 = vmatprep.subr.mxu0 0.0
    %174 = vmatpush1.msra.mxu0 %v156
    %175 = vmatprep.subr.mxu0 0.0
    %176 = vmatpush1.msra.mxu0 %v155
    %177 = vmatprep.subr.mxu0 0.0
    %178 = vmatpush1.msra.mxu0 %v154
    %179 = vmatprep.subr.mxu0 0.0
    %180 = vmatpush1.msra.mxu0 %v153
    %181 = vmatprep.subr.mxu0 0.0
    %182 = vmatpush1.msra.mxu0 %v152
    %183 = vmatprep.subr.mxu0 0.0
    %184 = vmatpush1.msra.mxu0 %v151
    %185 = vmatprep.subr.mxu0 0.0
    %186 = vmatpush1.msra.mxu0 %v150
    %187 = vmatprep.subr.mxu0 0.0
    %188 = vmatpush1.msra.mxu0 %v149
    %189 = vmatprep.subr.mxu0 0.0
    %190 = vmatpush1.msra.mxu0 %v148
    %191 = vmatprep.subr.mxu0 0.0
    %192 = vmatpush1.msra.mxu0 %v147
    %193 = vmatprep.subr.mxu0 0.0
    %194 = vmatpush1.msra.mxu0 %v146
    %195 = vmatprep.subr.mxu0 0.0
    %196 = vmatpush1.msra.mxu0 %v145
    %197 = vmatprep.subr.mxu0 0.0
    %198 = vmatpush1.msra.mxu0 %v144
    %199 = vmatprep.subr.mxu0 0.0
    %200 = vmatpush2.msra.mxu0 0.0
    %201 = vmatprep.subr.mxu0 0.0
    %202 = vmatpush2.msra.mxu0 0.0
    %203 = vmatprep.subr.mxu0 0.0
    %204 = vmatpush2.msra.mxu0 0.0
    %205 = vmatprep.subr.mxu0 0.0
    %206 = vmatpush2.msra.mxu0 0.0
    %207 = vmatprep.subr.mxu0 0.0
    %208 = vmatpush2.msra.mxu0 0.0
    %209 = vmatprep.subr.mxu0 0.0
    %210 = vmatpush2.msra.mxu0 0.0
    %211 = vmatprep.subr.mxu0 0.0
    %212 = vmatpush2.msra.mxu0 0.0
    %213 = vmatprep.subr.mxu0 0.0
    %214 = vmatpush2.msra.mxu0 0.0
    %215 = vmatprep.subr.mxu0 0.0
    %216 = vmatpush2.msra.mxu0 0.0
    %217 = vmatprep.subr.mxu0 0.0
    %218 = vmatpush2.msra.mxu0 0.0
    %219 = vmatprep.subr.mxu0 0.0
    %220 = vmatpush2.msra.mxu0 0.0
    %221 = vmatprep.subr.mxu0 0.0
    %222 = vmatpush2.msra.mxu0 0.0
    %223 = vmatprep.subr.mxu0 0.0
    %224 = vmatpush2.msra.mxu0 0.0
    %225 = vmatprep.subr.mxu0 0.0
    %226 = vmatpush2.msra.mxu0 0.0
    %227 = vmatprep.subr.mxu0 0.0
    %228 = vmatpush2.msra.mxu0 0.0
    %229 = vmatprep.subr.mxu0 0.0
    %230 = vmatpush2.msra.mxu0 0.0
    %231 = vmatprep.mubr.f32.mxu0 0.0
    %232 = vmatmul.mubr.f32.gmra.mxu0 %v142
    %v233 = vpop.f32.mrf.mxu0
    %v234 = vadd.f32 %v165, %v233
    %v235 = vpop.f32.mrf.mxu0
    %236 = vmatprep.mubr.f32.mxu0 0.0
    %237 = vmatmul.mubr.f32.gmra.mxu0 %v143
    %v238 = vpop.f32.mrf.mxu0
    %v239 = vadd.f32 %v165, %v238
    %v240 = vpop.f32.mrf.mxu0
    %241 = vdwg.mxu0
    %vm242 = vcmask 105472
    %243 = vst.msk [vmem:[#allocation2] sm:$0xff] %vm242, %v234
    %244 = vst.msk [vmem:[#allocation2 + $0x8] sm:$0xff] %vm242, %v239
    // Predicated region
    $region22: #{tpu_custom_call.1} parent=1 // pred_check
      _
    $region23: #{tpu_custom_call.1} parent=1 // pred_check_branch
      %246 = sbr.rel (0) target = $region25
    $region24: #{tpu_custom_call.1} parent=1 // pred_region
      %s248 = ssub.s32 256, 256
      %249 = vsyncadd [#allocation3], %s248
      %s250 = sshll.u32 [#allocation2], 4
      %s251 = int_to_ptr.vmem [resolvable:$true] %s250
      %256 = dma.vmem_to_hbm [thread:$0]  %s251, 256, %s5, [#allocation3], 128, 128, 8
    $region25: #{tpu_custom_call.1} parent=1 // pred_fallthru
      _
    // Predicated region
    $region26: #{tpu_custom_call.1} parent=1 // pred_check
      _
    $region27: #{tpu_custom_call.1} parent=1 // pred_check_branch
      %258 = sbr.rel (0) target = $region29
    $region28: #{tpu_custom_call.1} parent=1 // pred_region
      %259 = dma.done [#allocation3], 256
    $region29: #{tpu_custom_call.1} parent=1 // pred_fallthru
      _
    %260 = vsyncpa [#allocation3], 1

</llo_original>
